<compile_context>
chip_gen: v7x
topology: tpu7x:2x2x1
jax: 0.10.0
libtpu: 0.0.40
codegen_flags: <defaults>
</compile_context>

<pallas_src>
import numpy as np
import jax
import jax.numpy as jnp
from jax.scipy.linalg import block_diag
from jax.experimental import pallas as pl
from jax.experimental.pallas import tpu as pltpu


def msdi_kernel(x_ref,
                w1e_ref, b1e_ref, w2c_ref, b2c_ref, mavg_ref,
                gamma_ref, beta_ref, wac1_ref, bc1_ref, wc2_ref, bc2_ref,
                out_ref):
    """One batch tile: x_ref (TB, N*Din) -> out_ref (TB, n_classes).

    Every heavy intermediate has N*P (=256) lanes, so VPU work is lane-dense;
    group-wise LayerNorm statistics and the pairwise-difference aggregation
    ride the MXU via precomputed block-diagonal / segmented-mean matrices.
    """
    x2 = x_ref[...]                                            # (TB, N*Din)

    # proj Linear #1 for all N set elements at once (block-diagonal W1) + ReLU.
    h1 = jnp.dot(x2, w1e_ref[...], preferred_element_type=jnp.float32) + b1e_ref[...]
    h1 = jnp.maximum(h1, 0.0)                                  # (TB, N*P)

    # proj Linear #2 fused with LayerNorm centering: c = h2 - mean_group(h2)
    # (w2c = blockdiag(w2 @ (I - 11^T/P)), b2c = (b2 - mean(b2)) tiled).
    c = jnp.dot(h1, w2c_ref[...], preferred_element_type=jnp.float32) + b2c_ref[...]

    # Group (per set element) variance via a segmented-mean matmul; the matmul
    # also broadcasts the statistic back across each 32-lane group.
    var = jnp.dot(c * c, mavg_ref[...], preferred_element_type=jnp.float32)
    z = c * jax.lax.rsqrt(var + 1e-5) * gamma_ref[...] + beta_ref[...]
    z = jnp.maximum(z, 0.0)                                    # (TB, N*P)

    # mean over (i<j) pairwise differences == fixed per-element weights w_k,
    # folded into the first classifier Linear (wac1 = W_agg @ wc1, precomputed).
    c1 = jnp.dot(z, wac1_ref[...], preferred_element_type=jnp.float32) + bc1_ref[...]
    c1 = jnp.maximum(c1, 0.0)                                  # (TB, hidden)

    # classifier Linear #2 -> compact (TB, n_classes) store, no lane padding.
    out_ref[...] = jnp.dot(c1, wc2_ref[...], preferred_element_type=jnp.float32) + bc2_ref[...]


def _choose_batch_tile(B, tb_max=1024):
    """Batch rows per grid step.

    * multiple of 8 (f32 sublane granule), capped at tb_max so the per-step
      footprint (x tile + out tile + (TB, N*P) intermediates, double-buffered)
      stays a few MiB — comfortably inside v7x's 64 MiB VMEM, not just
      v5e/v6e's 128 MiB;
    * <= ceil(B/2) (rounded up to 8) whenever B >= 16, so the grid has at
      least 2 steps and "parallel" can shard across v7x's two TensorCores;
    * never degrades to a pathological tiny tile for awkward B — the batch is
      padded to a tile multiple instead.
    """
    if B <= 8:
        return 8
    half = -(-B // 2)
    half8 = -(-half // 8) * 8
    return max(8, min(tb_max, half8))


def init_params(key, input_dim=2, proj_dim=32, hidden=32, n_classes=2):
    """Deterministic parameter init (PyTorch-style uniform(+-1/sqrt(fan_in)))."""
    def linear(k, fan_in, fan_out):
        k1, k2 = jax.random.split(k)
        bound = 1.0 / np.sqrt(fan_in)
        w = jax.random.uniform(k1, (fan_in, fan_out), jnp.float32, -bound, bound)
        b = jax.random.uniform(k2, (1, fan_out), jnp.float32, -bound, bound)
        return w, b

    k1, k2, k3, k4 = jax.random.split(key, 4)
    w1, b1 = linear(k1, input_dim, proj_dim)
    w2, b2 = linear(k2, proj_dim, proj_dim)
    gamma = jnp.ones((1, proj_dim), jnp.float32)
    beta = jnp.zeros((1, proj_dim), jnp.float32)
    wc1, bc1 = linear(k3, proj_dim, hidden)
    wc2, bc2 = linear(k4, hidden, n_classes)
    return dict(w1=w1, b1=b1, w2=w2, b2=b2, gamma=gamma, beta=beta,
                wc1=wc1, bc1=bc1, wc2=wc2, bc2=bc2)


def msdi_forward(x, params, tb_max=1024):
    B, N, Din = x.shape
    assert N >= 2, "pairwise-difference mean needs at least 2 set elements"
    P = params["w2"].shape[1]
    NC = params["wc2"].shape[1]
    ND, NP = N * Din, N * P
    f32 = jnp.float32

    w1, b1 = params["w1"], params["b1"]
    w2, b2 = params["w2"], params["b2"]
    gamma, beta = params["gamma"], params["beta"]
    wc1, bc1 = params["wc1"], params["bc1"]
    wc2, bc2 = params["wc2"], params["bc2"]

    # ---- batch-independent expanded weights (O(N^2 P^2) constants) ----
    center = jnp.eye(P, dtype=f32) - jnp.full((P, P), 1.0 / P, f32)     # I - 11^T/P
    w1e = block_diag(*([w1] * N))                        # (N*Din, N*P)
    b1e = jnp.tile(b1, (1, N))                           # (1, N*P)
    w2c = block_diag(*([w2 @ center] * N))               # Linear-2 fused with LN centering
    b2c = jnp.tile(b2 @ center, (1, N))
    mavg = block_diag(*([jnp.full((P, P), 1.0 / P, f32)] * N))  # segmented group-mean
    gamma_e = jnp.tile(gamma, (1, N))
    beta_e = jnp.tile(beta, (1, N))
    # mean over upper-triangular pairwise differences -> per-element weight w_k,
    # folded into the first classifier layer.
    wk = (2.0 * jnp.arange(N, dtype=f32) - (N - 1)) / (N * (N - 1) / 2.0)
    wac1 = jnp.kron(wk[:, None], jnp.eye(P, dtype=f32)) @ wc1    # (N*P, hidden)

    # ---- batch tiling: (B, N, Din) -> (B, N*Din) is a free contiguous merge ----
    TB = _choose_batch_tile(B, tb_max)
    num_blocks = -(-B // TB)
    Bp = num_blocks * TB
    x2 = x.reshape(B, ND)
    if Bp != B:
        x2 = jnp.pad(x2, ((0, Bp - B), (0, 0)))          # zero rows, sliced off below

    weight_args = [w1e, b1e, w2c, b2c, mavg, gamma_e, beta_e, wac1, bc1, wc2, bc2]
    # Full-array blocks with constant index maps -> weights stay VMEM-resident
    # across grid steps (no re-DMA per step).  Total < 1 MiB.
    weight_specs = [pl.BlockSpec(w.shape, lambda i: (0, 0)) for w in weight_args]

    out = pl.pallas_call(
        msdi_kernel,
        out_shape=jax.ShapeDtypeStruct((Bp, NC), f32),
        grid=(num_blocks,),
        in_specs=[pl.BlockSpec((TB, ND), lambda i: (i, 0))] + weight_specs,
        out_specs=pl.BlockSpec((TB, NC), lambda i: (i, 0)),   # compact, no lane padding
        compiler_params=pltpu.CompilerParams(
            dimension_semantics=("parallel",),
            vmem_limit_bytes=48 * 1024 * 1024),
    )(x2, *weight_args)

    return out if Bp == B else out[:B]


def msdi_reference(x, params):
    """Pure-JAX reference matching the PyTorch forward literally."""
    h = jnp.maximum(x @ params["w1"] + params["b1"][0], 0.0)
    h = h @ params["w2"] + params["b2"][0]
    mu = jnp.mean(h, axis=-1, keepdims=True)
    var = jnp.mean((h - mu) ** 2, axis=-1, keepdims=True)
    z = (h - mu) / jnp.sqrt(var + 1e-5) * params["gamma"][0] + params["beta"][0]
    z = jnp.maximum(z, 0.0)                                      # (B, N, P)
    d1 = z[:, None, :, :] - z[:, :, None, :]                     # (B, N, N, P)
    iu, ju = np.triu_indices(z.shape[1], k=1)
    d1 = d1[:, iu, ju, :]                                        # (B, n_pairs, P)
    agg = d1.mean(axis=1)                                        # (B, P)
    c = jnp.maximum(agg @ params["wc1"] + params["bc1"][0], 0.0)
    return c @ params["wc2"] + params["bc2"][0]


if __name__ == "__main__":
    B, N, INPUT_DIM, PROJ_DIM = 16, 8, 2, 32
    key = jax.random.PRNGKey(0)
    kx, kp = jax.random.split(key)
    x = jax.random.normal(kx, (B, N, INPUT_DIM), jnp.float32)
    params = init_params(kp, input_dim=INPUT_DIM, proj_dim=PROJ_DIM)

    out = msdi_forward(x, params)
    out = jax.block_until_ready(out)

    ref = msdi_reference(x, params)
    np.testing.assert_allclose(np.asarray(out), np.asarray(ref), rtol=1e-3, atol=1e-3)
    print("KERNEL_OK")
</pallas_src>

<mosaic_0001>
module attributes {stable_mosaic.version = 11 : i64} {
  func.func @msdi_kernel(%arg0: i32, %arg1: memref<8x16xf32, #tpu.memory_space<vmem>>, %arg2: memref<16x256xf32, #tpu.memory_space<vmem>>, %arg3: memref<1x256xf32, #tpu.memory_space<vmem>>, %arg4: memref<256x256xf32, #tpu.memory_space<vmem>>, %arg5: memref<1x256xf32, #tpu.memory_space<vmem>>, %arg6: memref<256x256xf32, #tpu.memory_space<vmem>>, %arg7: memref<1x256xf32, #tpu.memory_space<vmem>>, %arg8: memref<1x256xf32, #tpu.memory_space<vmem>>, %arg9: memref<256x32xf32, #tpu.memory_space<vmem>>, %arg10: memref<1x32xf32, #tpu.memory_space<vmem>>, %arg11: memref<32x2xf32, #tpu.memory_space<vmem>>, %arg12: memref<1x2xf32, #tpu.memory_space<vmem>>, %arg13: memref<8x2xf32, #tpu.memory_space<vmem>>) attributes {dimension_semantics = [#tpu.dimension_semantics<parallel>], iteration_bounds = array<i64: 2>, scalar_prefetch = 0 : i64, scratch_operands = 0 : i64, tpu.core_type = #tpu.core_type<tc>, window_params = [{transform_indices = @transform_0, window_bounds = array<i64: 8, 16>}, {pipeline_mode = #tpu.pipeline_mode<synchronous>, transform_indices = @transform_1, window_bounds = array<i64: 16, 256>}, {pipeline_mode = #tpu.pipeline_mode<synchronous>, transform_indices = @transform_2, window_bounds = array<i64: 1, 256>}, {pipeline_mode = #tpu.pipeline_mode<synchronous>, transform_indices = @transform_3, window_bounds = array<i64: 256, 256>}, {pipeline_mode = #tpu.pipeline_mode<synchronous>, transform_indices = @transform_4, window_bounds = array<i64: 1, 256>}, {pipeline_mode = #tpu.pipeline_mode<synchronous>, transform_indices = @transform_5, window_bounds = array<i64: 256, 256>}, {pipeline_mode = #tpu.pipeline_mode<synchronous>, transform_indices = @transform_6, window_bounds = array<i64: 1, 256>}, {pipeline_mode = #tpu.pipeline_mode<synchronous>, transform_indices = @transform_7, window_bounds = array<i64: 1, 256>}, {pipeline_mode = #tpu.pipeline_mode<synchronous>, transform_indices = @transform_8, window_bounds = array<i64: 256, 32>}, {pipeline_mode = #tpu.pipeline_mode<synchronous>, transform_indices = @transform_9, window_bounds = array<i64: 1, 32>}, {pipeline_mode = #tpu.pipeline_mode<synchronous>, transform_indices = @transform_10, window_bounds = array<i64: 32, 2>}, {pipeline_mode = #tpu.pipeline_mode<synchronous>, transform_indices = @transform_11, window_bounds = array<i64: 1, 2>}, {transform_indices = @transform_12, window_bounds = array<i64: 8, 2>}]} {
    %c0 = arith.constant 0 : index
    %c0_0 = arith.constant 0 : index
    %0 = vector.load %arg1[%c0, %c0_0] : memref<8x16xf32, #tpu.memory_space<vmem>>, vector<8x16xf32>
    %c0_1 = arith.constant 0 : index
    %c0_2 = arith.constant 0 : index
    %1 = vector.load %arg2[%c0_1, %c0_2] : memref<16x256xf32, #tpu.memory_space<vmem>>, vector<16x256xf32>
    %cst = arith.constant dense<0.000000e+00> : vector<8x256xf32>
    %2 = tpu.matmul %0, %1, %cst {dimension_numbers = #tpu.dot_dimension_numbers<[1], [0], [0], [1], [0, 0, 1, 1], [], []>} : vector<8x16xf32>, vector<16x256xf32>, vector<8x256xf32> -> vector<8x256xf32>
    %c0_3 = arith.constant 0 : index
    %c0_4 = arith.constant 0 : index
    %3 = vector.load %arg3[%c0_3, %c0_4] : memref<1x256xf32, #tpu.memory_space<vmem>>, vector<1x256xf32>
    %4 = vector.broadcast %3 : vector<1x256xf32> to vector<8x256xf32>
    %5 = arith.addf %2, %4 : vector<8x256xf32>
    %cst_5 = arith.constant 0.000000e+00 : f32
    %6 = vector.broadcast %cst_5 : f32 to vector<8x256xf32>
    %7 = arith.maximumf %5, %6 : vector<8x256xf32>
    %c0_6 = arith.constant 0 : index
    %c0_7 = arith.constant 0 : index
    %8 = vector.load %arg4[%c0_6, %c0_7] : memref<256x256xf32, #tpu.memory_space<vmem>>, vector<256x256xf32>
    %cst_8 = arith.constant dense<0.000000e+00> : vector<8x256xf32>
    %9 = tpu.matmul %7, %8, %cst_8 {dimension_numbers = #tpu.dot_dimension_numbers<[1], [0], [0], [1], [0, 0, 1, 1], [], []>} : vector<8x256xf32>, vector<256x256xf32>, vector<8x256xf32> -> vector<8x256xf32>
    %c0_9 = arith.constant 0 : index
    %c0_10 = arith.constant 0 : index
    %10 = vector.load %arg5[%c0_9, %c0_10] : memref<1x256xf32, #tpu.memory_space<vmem>>, vector<1x256xf32>
    %11 = vector.broadcast %10 : vector<1x256xf32> to vector<8x256xf32>
    %12 = arith.addf %9, %11 : vector<8x256xf32>
    %13 = arith.mulf %12, %12 : vector<8x256xf32>
    %c0_11 = arith.constant 0 : index
    %c0_12 = arith.constant 0 : index
    %14 = vector.load %arg6[%c0_11, %c0_12] : memref<256x256xf32, #tpu.memory_space<vmem>>, vector<256x256xf32>
    %cst_13 = arith.constant dense<0.000000e+00> : vector<8x256xf32>
    %15 = tpu.matmul %13, %14, %cst_13 {dimension_numbers = #tpu.dot_dimension_numbers<[1], [0], [0], [1], [0, 0, 1, 1], [], []>} : vector<8x256xf32>, vector<256x256xf32>, vector<8x256xf32> -> vector<8x256xf32>
    %cst_14 = arith.constant 9.99999974E-6 : f32
    %16 = vector.broadcast %cst_14 : f32 to vector<8x256xf32>
    %17 = arith.addf %15, %16 : vector<8x256xf32>
    %18 = math.rsqrt %17 : vector<8x256xf32>
    %19 = arith.mulf %12, %18 : vector<8x256xf32>
    %c0_15 = arith.constant 0 : index
    %c0_16 = arith.constant 0 : index
    %20 = vector.load %arg7[%c0_15, %c0_16] : memref<1x256xf32, #tpu.memory_space<vmem>>, vector<1x256xf32>
    %21 = vector.broadcast %20 : vector<1x256xf32> to vector<8x256xf32>
    %22 = arith.mulf %19, %21 : vector<8x256xf32>
    %c0_17 = arith.constant 0 : index
    %c0_18 = arith.constant 0 : index
    %23 = vector.load %arg8[%c0_17, %c0_18] : memref<1x256xf32, #tpu.memory_space<vmem>>, vector<1x256xf32>
    %24 = vector.broadcast %23 : vector<1x256xf32> to vector<8x256xf32>
    %25 = arith.addf %22, %24 : vector<8x256xf32>
    %cst_19 = arith.constant 0.000000e+00 : f32
    %26 = vector.broadcast %cst_19 : f32 to vector<8x256xf32>
    %27 = arith.maximumf %25, %26 : vector<8x256xf32>
    %c0_20 = arith.constant 0 : index
    %c0_21 = arith.constant 0 : index
    %28 = vector.load %arg9[%c0_20, %c0_21] : memref<256x32xf32, #tpu.memory_space<vmem>>, vector<256x32xf32>
    %cst_22 = arith.constant dense<0.000000e+00> : vector<8x32xf32>
    %29 = tpu.matmul %27, %28, %cst_22 {dimension_numbers = #tpu.dot_dimension_numbers<[1], [0], [0], [1], [0, 0, 1, 1], [], []>} : vector<8x256xf32>, vector<256x32xf32>, vector<8x32xf32> -> vector<8x32xf32>
    %c0_23 = arith.constant 0 : index
    %c0_24 = arith.constant 0 : index
    %30 = vector.load %arg10[%c0_23, %c0_24] : memref<1x32xf32, #tpu.memory_space<vmem>>, vector<1x32xf32>
    %31 = vector.broadcast %30 : vector<1x32xf32> to vector<8x32xf32>
    %32 = arith.addf %29, %31 : vector<8x32xf32>
    %cst_25 = arith.constant 0.000000e+00 : f32
    %33 = vector.broadcast %cst_25 : f32 to vector<8x32xf32>
    %34 = arith.maximumf %32, %33 : vector<8x32xf32>
    %c0_26 = arith.constant 0 : index
    %c0_27 = arith.constant 0 : index
    %35 = vector.load %arg11[%c0_26, %c0_27] : memref<32x2xf32, #tpu.memory_space<vmem>>, vector<32x2xf32>
    %cst_28 = arith.constant dense<0.000000e+00> : vector<8x2xf32>
    %36 = tpu.matmul %34, %35, %cst_28 {dimension_numbers = #tpu.dot_dimension_numbers<[1], [0], [0], [1], [0, 0, 1, 1], [], []>} : vector<8x32xf32>, vector<32x2xf32>, vector<8x2xf32> -> vector<8x2xf32>
    %c0_29 = arith.constant 0 : index
    %c0_30 = arith.constant 0 : index
    %37 = vector.load %arg12[%c0_29, %c0_30] : memref<1x2xf32, #tpu.memory_space<vmem>>, vector<1x2xf32>
    %38 = vector.broadcast %37 : vector<1x2xf32> to vector<8x2xf32>
    %39 = arith.addf %36, %38 : vector<8x2xf32>
    %c0_31 = arith.constant 0 : index
    %c0_32 = arith.constant 0 : index
    %40 = vector.load %arg13[%c0_31, %c0_32] : memref<8x2xf32, #tpu.memory_space<vmem>>, vector<8x2xf32>
    tpu.vector_store %arg13[%c0_31, %c0_32], %39 {strides = array<i32>} : memref<8x2xf32, #tpu.memory_space<vmem>>, vector<8x2xf32>,
    return
  }
  func.func @transform_0(%arg0: i32) -> (i32, i32) {
    %c0_i32 = arith.constant 0 : i32
    %c0_i32_0 = arith.constant 0 : i32
    return %arg0, %c0_i32 : i32, i32
  }
  func.func @transform_1(%arg0: i32) -> (i32, i32) {
    %c0_i32 = arith.constant 0 : i32
    %c0_i32_0 = arith.constant 0 : i32
    %c0_i32_1 = arith.constant 0 : i32
    return %c0_i32, %c0_i32_0 : i32, i32
  }
  func.func @transform_2(%arg0: i32) -> (i32, i32) {
    %c0_i32 = arith.constant 0 : i32
    %c0_i32_0 = arith.constant 0 : i32
    %c0_i32_1 = arith.constant 0 : i32
    return %c0_i32, %c0_i32_0 : i32, i32
  }
  func.func @transform_3(%arg0: i32) -> (i32, i32) {
    %c0_i32 = arith.constant 0 : i32
    %c0_i32_0 = arith.constant 0 : i32
    %c0_i32_1 = arith.constant 0 : i32
    return %c0_i32, %c0_i32_0 : i32, i32
  }
  func.func @transform_4(%arg0: i32) -> (i32, i32) {
    %c0_i32 = arith.constant 0 : i32
    %c0_i32_0 = arith.constant 0 : i32
    %c0_i32_1 = arith.constant 0 : i32
    return %c0_i32, %c0_i32_0 : i32, i32
  }
  func.func @transform_5(%arg0: i32) -> (i32, i32) {
    %c0_i32 = arith.constant 0 : i32
    %c0_i32_0 = arith.constant 0 : i32
    %c0_i32_1 = arith.constant 0 : i32
    return %c0_i32, %c0_i32_0 : i32, i32
  }
  func.func @transform_6(%arg0: i32) -> (i32, i32) {
    %c0_i32 = arith.constant 0 : i32
    %c0_i32_0 = arith.constant 0 : i32
    %c0_i32_1 = arith.constant 0 : i32
    return %c0_i32, %c0_i32_0 : i32, i32
  }
  func.func @transform_7(%arg0: i32) -> (i32, i32) {
    %c0_i32 = arith.constant 0 : i32
    %c0_i32_0 = arith.constant 0 : i32
    %c0_i32_1 = arith.constant 0 : i32
    return %c0_i32, %c0_i32_0 : i32, i32
  }
  func.func @transform_8(%arg0: i32) -> (i32, i32) {
    %c0_i32 = arith.constant 0 : i32
    %c0_i32_0 = arith.constant 0 : i32
    %c0_i32_1 = arith.constant 0 : i32
    return %c0_i32, %c0_i32_0 : i32, i32
  }
  func.func @transform_9(%arg0: i32) -> (i32, i32) {
    %c0_i32 = arith.constant 0 : i32
    %c0_i32_0 = arith.constant 0 : i32
    %c0_i32_1 = arith.constant 0 : i32
    return %c0_i32, %c0_i32_0 : i32, i32
  }
  func.func @transform_10(%arg0: i32) -> (i32, i32) {
    %c0_i32 = arith.constant 0 : i32
    %c0_i32_0 = arith.constant 0 : i32
    %c0_i32_1 = arith.constant 0 : i32
    return %c0_i32, %c0_i32_0 : i32, i32
  }
  func.func @transform_11(%arg0: i32) -> (i32, i32) {
    %c0_i32 = arith.constant 0 : i32
    %c0_i32_0 = arith.constant 0 : i32
    %c0_i32_1 = arith.constant 0 : i32
    return %c0_i32, %c0_i32_0 : i32, i32
  }
  func.func @transform_12(%arg0: i32) -> (i32, i32) {
    %c0_i32 = arith.constant 0 : i32
    %c0_i32_0 = arith.constant 0 : i32
    return %arg0, %c0_i32 : i32, i32
  }
}

</mosaic_0001>

<llo_original>
// kernel: tpu_custom_call.1
$region0: #{tpu_custom_call.1}
  #allocation0 [shape = 'u32[]', space=smem, size = 0x4, offset = 0x4, fixed_abs, tag = 'smem constant byte address 0x4 - core index']
  #allocation1 [shape = 'u32[144,128]{1,0:T(1,128)}', space=vmem, size = 0x12000, scoped, tag = 'internal scratch']
  %s0 = inlined_call_operand.vmem [shape: f32[16,16], index: 0, kind: input, shape index: {}]
  %s1 = inlined_call_operand.vmem [shape: f32[16,256], index: 1, kind: input, shape index: {}]
  %s2 = inlined_call_operand.vmem [shape: f32[1,256], index: 2, kind: input, shape index: {}]
  %s3 = inlined_call_operand.hbm [shape: f32[256,256], index: 3, kind: input, shape index: {}]
  %s4 = inlined_call_operand.vmem [shape: f32[1,256], index: 4, kind: input, shape index: {}]
  %s5 = inlined_call_operand.hbm [shape: f32[256,256], index: 5, kind: input, shape index: {}]
  %s6 = inlined_call_operand.vmem [shape: f32[1,256], index: 6, kind: input, shape index: {}]
  %s7 = inlined_call_operand.vmem [shape: f32[1,256], index: 7, kind: input, shape index: {}]
  %s8 = inlined_call_operand.vmem [shape: f32[256,32], index: 8, kind: input, shape index: {}]
  %s9 = inlined_call_operand.vmem [shape: f32[1,32], index: 9, kind: input, shape index: {}]
  %s10 = inlined_call_operand.vmem [shape: f32[32,2], index: 10, kind: input, shape index: {}]
  %s11 = inlined_call_operand.vmem [shape: f32[1,2], index: 11, kind: input, shape index: {}]
  %s12 = inlined_call_operand.vmem [shape: f32[16,2], index: 12, kind: output, shape index: {}]
  %s13 = sld [smem:[#allocation0]]
  $region89: #{tpu_custom_call.1} parent=0
    _
  %s15 = ssub.s32 1, %s13
  %s16 = scalar_select 0, %s15, %s13
  $region1: #{tpu_custom_call.1} parent=0
    #allocation2 [shape = 'u8[262144]{0}', space=vmem, size = 0x40000, scoped, tag = 'input window, operand 3, single buffered']
    #allocation3 [shape = 's32[2]{0}', space=sflag, size = 0x8, scoped, tag = 'scoped memory for tpu_custom_call.1']
    #allocation4 [shape = 'u8[262144]{0}', space=vmem, size = 0x40000, scoped, tag = 'input window, operand 5, single buffered']
    #allocation5 [shape = 's32[1]{0}', space=sflag, size = 0x4, scoped, tag = 'scoped memory for tpu_custom_call.1']
    %17 = vsyncpa [#allocation3], 0
    %18 = vsyncpa [#allocation5], 0
    loop: start=0, step=1, limit=4
    $region2: #{tpu_custom_call.1} parent=1 // loop_pre_header
      _
    $region3: #{tpu_custom_call.1} parent=1 // loop_header
      %s20 = sphi 0, %s24
      %p21 = scmp.ge.s32.totalorder %s20, 4
      %s30 = sphi 0, %s32
      %s33 = sphi 0, %s30
      %s34 = sphi 0, %s33
      %s50 = sphi 0, %s34
      %s54 = sphi 0, %s54
      %s56 = sphi 0, %s54
      %s57 = sphi 0, %s56
      %s71 = sphi 0, %s57
      %s75 = sphi 0, %s75
      %s77 = sphi 0, %s75
      %s78 = sphi 0, %s77
      %s92 = sphi 0, %s78
      %s96 = sphi 0, %s96
      %s98 = sphi 0, %s96
      %s99 = sphi 0, %s98
      %s113 = sphi 0, %s99
      %s117 = sphi 0, %s117
      %s119 = sphi 0, %s117
      %s120 = sphi 0, %s119
      %s134 = sphi 0, %s120
      %s138 = sphi 0, %s138
      %s140 = sphi 0, %s138
      %s141 = sphi 0, %s140
      %s155 = sphi 0, %s141
      %s159 = sphi 0, %s159
      %s161 = sphi 0, %s159
      %s162 = sphi 0, %s161
      %s176 = sphi 0, %s162
      %s180 = sphi 0, %s180
      %s182 = sphi 0, %s180
      %s183 = sphi 0, %s182
      %s197 = sphi 0, %s183
      %s201 = sphi 0, %s201
      %s203 = sphi 0, %s201
      %s204 = sphi 0, %s203
      %s218 = sphi 0, %s204
      %s222 = sphi 0, %s222
      %s224 = sphi 0, %s222
      %s225 = sphi 0, %s224
      %s239 = sphi 0, %s225
      %s243 = sphi 0, %s243
      %s245 = sphi 0, %s243
      %s246 = sphi 0, %s245
      %s260 = sphi 0, %s246
      %s264 = sphi 0, %s264
      %s266 = sphi 0, %s264
      %s267 = sphi 0, %s266
      %s281 = sphi 0, %s267
      %s287 = sphi 0, %s289
      %s290 = sphi 0, %s287
      %s291 = sphi 0, %s290
      %s307 = sphi 0, %s291
    $region4: #{tpu_custom_call.1} parent=1 // loop_header_branch
      %23 = sbr.rel (%p21) target = $region8
    $region5: #{tpu_custom_call.1} parent=1 // loop_body
      %s25 = ssub.s32 %s20, 1
      %s26 = ssub.s32 %s20, 2
      %s27 = sadd.s32 %s20, 1
      %s28 = ssub.s32 %s20, %s27
      %p29 = scmp.eq.s32.totalorder %s28, 0
      %s31 = sadd.s32 %s30, 1
      %s32 = scalar_select %p29, %s30, %s31
      %p35 = pneg %p29
      %p36 = scmp.eq.s32.totalorder %s20, 1
      %p37 = por %p35, %p36
      %p38 = scmp.ne.s32.totalorder %s30, %s33
      %p39 = scmp.eq.s32.totalorder %s20, 0
      %p40 = por %p38, %p39
      %p41 = scmp.ne.s32.totalorder %s30, %s33
      %p42 = scmp.eq.s32.totalorder %s25, 1
      %p43 = por %p41, %p42
      %p44 = scmp.ne.s32.totalorder %s33, %s34
      %p45 = scmp.eq.s32.totalorder %s25, 0
      %p46 = por %p44, %p45
      %p47 = scmp.ne.s32.totalorder %s33, %s34
      %p48 = scmp.eq.s32.totalorder %s26, 1
      %p49 = por %p47, %p48
      %p51 = scmp.ne.s32.totalorder %s34, %s50
      %p52 = scmp.eq.s32.totalorder %s26, 0
      %p53 = por %p51, %p52
      %s55 = sadd.s32 %s54, 1
      %p58 = scmp.eq.s32.totalorder %s20, 1
      %p59 = scmp.ne.s32.totalorder %s54, %s56
      %p60 = scmp.eq.s32.totalorder %s20, 0
      %p61 = por %p59, %p60
      %p62 = scmp.ne.s32.totalorder %s54, %s56
      %p63 = scmp.eq.s32.totalorder %s25, 1
      %p64 = por %p62, %p63
      %p65 = scmp.ne.s32.totalorder %s56, %s57
      %p66 = scmp.eq.s32.totalorder %s25, 0
      %p67 = por %p65, %p66
      %p68 = scmp.ne.s32.totalorder %s56, %s57
      %p69 = scmp.eq.s32.totalorder %s26, 1
      %p70 = por %p68, %p69
      %p72 = scmp.ne.s32.totalorder %s57, %s71
      %p73 = scmp.eq.s32.totalorder %s26, 0
      %p74 = por %p72, %p73
      %s76 = sadd.s32 %s75, 1
      %p79 = scmp.eq.s32.totalorder %s20, 1
      %p80 = scmp.ne.s32.totalorder %s75, %s77
      %p81 = scmp.eq.s32.totalorder %s20, 0
      %p82 = por %p80, %p81
      %p83 = scmp.ne.s32.totalorder %s75, %s77
      %p84 = scmp.eq.s32.totalorder %s25, 1
      %p85 = por %p83, %p84
      %p86 = scmp.ne.s32.totalorder %s77, %s78
      %p87 = scmp.eq.s32.totalorder %s25, 0
      %p88 = por %p86, %p87
      %p89 = scmp.ne.s32.totalorder %s77, %s78
      %p90 = scmp.eq.s32.totalorder %s26, 1
      %p91 = por %p89, %p90
      %p93 = scmp.ne.s32.totalorder %s78, %s92
      %p94 = scmp.eq.s32.totalorder %s26, 0
      %p95 = por %p93, %p94
      %s97 = sadd.s32 %s96, 1
      %p100 = scmp.eq.s32.totalorder %s20, 1
      %p101 = scmp.ne.s32.totalorder %s96, %s98
      %p102 = scmp.eq.s32.totalorder %s20, 0
      %p103 = por %p101, %p102
      %p104 = scmp.ne.s32.totalorder %s96, %s98
      %p105 = scmp.eq.s32.totalorder %s25, 1
      %p106 = por %p104, %p105
      %p107 = scmp.ne.s32.totalorder %s98, %s99
      %p108 = scmp.eq.s32.totalorder %s25, 0
      %p109 = por %p107, %p108
      %p110 = scmp.ne.s32.totalorder %s98, %s99
      %p111 = scmp.eq.s32.totalorder %s26, 1
      %p112 = por %p110, %p111
      %p114 = scmp.ne.s32.totalorder %s99, %s113
      %p115 = scmp.eq.s32.totalorder %s26, 0
      %p116 = por %p114, %p115
      %s118 = sadd.s32 %s117, 1
      %p121 = scmp.eq.s32.totalorder %s20, 1
      %p122 = scmp.ne.s32.totalorder %s117, %s119
      %p123 = scmp.eq.s32.totalorder %s20, 0
      %p124 = por %p122, %p123
      %p125 = scmp.ne.s32.totalorder %s117, %s119
      %p126 = scmp.eq.s32.totalorder %s25, 1
      %p127 = por %p125, %p126
      %p128 = scmp.ne.s32.totalorder %s119, %s120
      %p129 = scmp.eq.s32.totalorder %s25, 0
      %p130 = por %p128, %p129
      %p131 = scmp.ne.s32.totalorder %s119, %s120
      %p132 = scmp.eq.s32.totalorder %s26, 1
      %p133 = por %p131, %p132
      %p135 = scmp.ne.s32.totalorder %s120, %s134
      %p136 = scmp.eq.s32.totalorder %s26, 0
      %p137 = por %p135, %p136
      %s139 = sadd.s32 %s138, 1
      %p142 = scmp.eq.s32.totalorder %s20, 1
      %p143 = scmp.ne.s32.totalorder %s138, %s140
      %p144 = scmp.eq.s32.totalorder %s20, 0
      %p145 = por %p143, %p144
      %p146 = scmp.ne.s32.totalorder %s138, %s140
      %p147 = scmp.eq.s32.totalorder %s25, 1
      %p148 = por %p146, %p147
      %p149 = scmp.ne.s32.totalorder %s140, %s141
      %p150 = scmp.eq.s32.totalorder %s25, 0
      %p151 = por %p149, %p150
      %p152 = scmp.ne.s32.totalorder %s140, %s141
      %p153 = scmp.eq.s32.totalorder %s26, 1
      %p154 = por %p152, %p153
      %p156 = scmp.ne.s32.totalorder %s141, %s155
      %p157 = scmp.eq.s32.totalorder %s26, 0
      %p158 = por %p156, %p157
      %s160 = sadd.s32 %s159, 1
      %p163 = scmp.eq.s32.totalorder %s20, 1
      %p164 = scmp.ne.s32.totalorder %s159, %s161
      %p165 = scmp.eq.s32.totalorder %s20, 0
      %p166 = por %p164, %p165
      %p167 = scmp.ne.s32.totalorder %s159, %s161
      %p168 = scmp.eq.s32.totalorder %s25, 1
      %p169 = por %p167, %p168
      %p170 = scmp.ne.s32.totalorder %s161, %s162
      %p171 = scmp.eq.s32.totalorder %s25, 0
      %p172 = por %p170, %p171
      %p173 = scmp.ne.s32.totalorder %s161, %s162
      %p174 = scmp.eq.s32.totalorder %s26, 1
      %p175 = por %p173, %p174
      %p177 = scmp.ne.s32.totalorder %s162, %s176
      %p178 = scmp.eq.s32.totalorder %s26, 0
      %p179 = por %p177, %p178
      %s181 = sadd.s32 %s180, 1
      %p184 = scmp.eq.s32.totalorder %s20, 1
      %p185 = scmp.ne.s32.totalorder %s180, %s182
      %p186 = scmp.eq.s32.totalorder %s20, 0
      %p187 = por %p185, %p186
      %p188 = scmp.ne.s32.totalorder %s180, %s182
      %p189 = scmp.eq.s32.totalorder %s25, 1
      %p190 = por %p188, %p189
      %p191 = scmp.ne.s32.totalorder %s182, %s183
      %p192 = scmp.eq.s32.totalorder %s25, 0
      %p193 = por %p191, %p192
      %p194 = scmp.ne.s32.totalorder %s182, %s183
      %p195 = scmp.eq.s32.totalorder %s26, 1
      %p196 = por %p194, %p195
      %p198 = scmp.ne.s32.totalorder %s183, %s197
      %p199 = scmp.eq.s32.totalorder %s26, 0
      %p200 = por %p198, %p199
      %s202 = sadd.s32 %s201, 1
      %p205 = scmp.eq.s32.totalorder %s20, 1
      %p206 = scmp.ne.s32.totalorder %s201, %s203
      %p207 = scmp.eq.s32.totalorder %s20, 0
      %p208 = por %p206, %p207
      %p209 = scmp.ne.s32.totalorder %s201, %s203
      %p210 = scmp.eq.s32.totalorder %s25, 1
      %p211 = por %p209, %p210
      %p212 = scmp.ne.s32.totalorder %s203, %s204
      %p213 = scmp.eq.s32.totalorder %s25, 0
      %p214 = por %p212, %p213
      %p215 = scmp.ne.s32.totalorder %s203, %s204
      %p216 = scmp.eq.s32.totalorder %s26, 1
      %p217 = por %p215, %p216
      %p219 = scmp.ne.s32.totalorder %s204, %s218
      %p220 = scmp.eq.s32.totalorder %s26, 0
      %p221 = por %p219, %p220
      %s223 = sadd.s32 %s222, 1
      %p226 = scmp.eq.s32.totalorder %s20, 1
      %p227 = scmp.ne.s32.totalorder %s222, %s224
      %p228 = scmp.eq.s32.totalorder %s20, 0
      %p229 = por %p227, %p228
      %p230 = scmp.ne.s32.totalorder %s222, %s224
      %p231 = scmp.eq.s32.totalorder %s25, 1
      %p232 = por %p230, %p231
      %p233 = scmp.ne.s32.totalorder %s224, %s225
      %p234 = scmp.eq.s32.totalorder %s25, 0
      %p235 = por %p233, %p234
      %p236 = scmp.ne.s32.totalorder %s224, %s225
      %p237 = scmp.eq.s32.totalorder %s26, 1
      %p238 = por %p236, %p237
      %p240 = scmp.ne.s32.totalorder %s225, %s239
      %p241 = scmp.eq.s32.totalorder %s26, 0
      %p242 = por %p240, %p241
      %s244 = sadd.s32 %s243, 1
      %p247 = scmp.eq.s32.totalorder %s20, 1
      %p248 = scmp.ne.s32.totalorder %s243, %s245
      %p249 = scmp.eq.s32.totalorder %s20, 0
      %p250 = por %p248, %p249
      %p251 = scmp.ne.s32.totalorder %s243, %s245
      %p252 = scmp.eq.s32.totalorder %s25, 1
      %p253 = por %p251, %p252
      %p254 = scmp.ne.s32.totalorder %s245, %s246
      %p255 = scmp.eq.s32.totalorder %s25, 0
      %p256 = por %p254, %p255
      %p257 = scmp.ne.s32.totalorder %s245, %s246
      %p258 = scmp.eq.s32.totalorder %s26, 1
      %p259 = por %p257, %p258
      %p261 = scmp.ne.s32.totalorder %s246, %s260
      %p262 = scmp.eq.s32.totalorder %s26, 0
      %p263 = por %p261, %p262
      %s265 = sadd.s32 %s264, 1
      %p268 = scmp.eq.s32.totalorder %s20, 1
      %p269 = scmp.ne.s32.totalorder %s264, %s266
      %p270 = scmp.eq.s32.totalorder %s20, 0
      %p271 = por %p269, %p270
      %p272 = scmp.ne.s32.totalorder %s264, %s266
      %p273 = scmp.eq.s32.totalorder %s25, 1
      %p274 = por %p272, %p273
      %p275 = scmp.ne.s32.totalorder %s266, %s267
      %p276 = scmp.eq.s32.totalorder %s25, 0
      %p277 = por %p275, %p276
      %p278 = scmp.ne.s32.totalorder %s266, %s267
      %p279 = scmp.eq.s32.totalorder %s26, 1
      %p280 = por %p278, %p279
      %p282 = scmp.ne.s32.totalorder %s267, %s281
      %p283 = scmp.eq.s32.totalorder %s26, 0
      %p284 = por %p282, %p283
      %s285 = ssub.s32 %s20, %s27
      %p286 = scmp.eq.s32.totalorder %s285, 0
      %s288 = sadd.s32 %s287, 1
      %s289 = scalar_select %p286, %s287, %s288
      %p292 = pneg %p286
      %p293 = scmp.eq.s32.totalorder %s20, 1
      %p294 = por %p292, %p293
      %p295 = scmp.ne.s32.totalorder %s287, %s290
      %p296 = scmp.eq.s32.totalorder %s20, 0
      %p297 = por %p295, %p296
      %p298 = scmp.ne.s32.totalorder %s287, %s290
      %p299 = scmp.eq.s32.totalorder %s25, 1
      %p300 = por %p298, %p299
      %p301 = scmp.ne.s32.totalorder %s290, %s291
      %p302 = scmp.eq.s32.totalorder %s25, 0
      %p303 = por %p301, %p302
      %p304 = scmp.ne.s32.totalorder %s290, %s291
      %p305 = scmp.eq.s32.totalorder %s26, 1
      %p306 = por %p304, %p305
      %p308 = scmp.ne.s32.totalorder %s291, %s307
      %p309 = scmp.eq.s32.totalorder %s26, 0
      %p310 = por %p308, %p309
      %p311 = scmp.le.s32.totalorder 1, %s20
      %p312 = scmp.lt.s32.totalorder %s20, 3
      %p313 = pnand %p311, %p312
      %p314 = pneg %p313
      // Predicated region
      $region9: #{tpu_custom_call.1} parent=5 // pred_check
        _
      $region10: #{tpu_custom_call.1} parent=5 // pred_check_branch
        %316 = sbr.rel (%p313) target = $region12
      $region11: #{tpu_custom_call.1} parent=5 // pred_region
        %s317 = ssub.s32 %s20, 1
        // Predicated region
        $region13: #{tpu_custom_call.1} parent=11 // pred_check
          %p318 = pneg %p67
        $region14: #{tpu_custom_call.1} parent=11 // pred_check_branch
          %320 = sbr.rel (%p318) target = $region16
        $region15: #{tpu_custom_call.1} parent=11 // pred_region
          _
        $region16: #{tpu_custom_call.1} parent=11 // pred_fallthru
          _
        // Predicated region
        $region17: #{tpu_custom_call.1} parent=11 // pred_check
          %p321 = pneg %p88
        $region18: #{tpu_custom_call.1} parent=11 // pred_check_branch
          %323 = sbr.rel (%p321) target = $region20
        $region19: #{tpu_custom_call.1} parent=11 // pred_region
          _
        $region20: #{tpu_custom_call.1} parent=11 // pred_fallthru
          _
        // Predicated region
        $region21: #{tpu_custom_call.1} parent=11 // pred_check
          %p324 = pneg %p109
        $region22: #{tpu_custom_call.1} parent=11 // pred_check_branch
          %326 = sbr.rel (%p324) target = $region24
        $region23: #{tpu_custom_call.1} parent=11 // pred_region
          %s328 = ssub.s32 8192, 8192
          %329 = vsyncadd [#allocation3], %s328
          %s330 = sshll.u32 [#allocation2], 4
          %s331 = int_to_ptr.vmem [resolvable:$true] %s330
          %336 = dma.hbm_to_vmem [thread:$0]  %s3, 8192, %s331, [#allocation3], 256, 256, 16
        $region24: #{tpu_custom_call.1} parent=11 // pred_fallthru
          _
        // Predicated region
        $region25: #{tpu_custom_call.1} parent=11 // pred_check
          %p337 = pneg %p130
        $region26: #{tpu_custom_call.1} parent=11 // pred_check_branch
          %339 = sbr.rel (%p337) target = $region28
        $region27: #{tpu_custom_call.1} parent=11 // pred_region
          _
        $region28: #{tpu_custom_call.1} parent=11 // pred_fallthru
          _
        // Predicated region
        $region29: #{tpu_custom_call.1} parent=11 // pred_check
          %p340 = pneg %p151
        $region30: #{tpu_custom_call.1} parent=11 // pred_check_branch
          %342 = sbr.rel (%p340) target = $region32
        $region31: #{tpu_custom_call.1} parent=11 // pred_region
          %s344 = ssub.s32 8192, 8192
          %345 = vsyncadd [#allocation5], %s344
          %s346 = sshll.u32 [#allocation4], 4
          %s347 = int_to_ptr.vmem [resolvable:$true] %s346
          %352 = dma.hbm_to_vmem [thread:$0]  %s5, 8192, %s347, [#allocation5], 256, 256, 16
        $region32: #{tpu_custom_call.1} parent=11 // pred_fallthru
          _
        // Predicated region
        $region33: #{tpu_custom_call.1} parent=11 // pred_check
          %p353 = pneg %p172
        $region34: #{tpu_custom_call.1} parent=11 // pred_check_branch
          %355 = sbr.rel (%p353) target = $region36
        $region35: #{tpu_custom_call.1} parent=11 // pred_region
          _
        $region36: #{tpu_custom_call.1} parent=11 // pred_fallthru
          _
        // Predicated region
        $region37: #{tpu_custom_call.1} parent=11 // pred_check
          %p356 = pneg %p193
        $region38: #{tpu_custom_call.1} parent=11 // pred_check_branch
          %358 = sbr.rel (%p356) target = $region40
        $region39: #{tpu_custom_call.1} parent=11 // pred_region
          _
        $region40: #{tpu_custom_call.1} parent=11 // pred_fallthru
          _
        // Predicated region
        $region41: #{tpu_custom_call.1} parent=11 // pred_check
          %p359 = pneg %p214
        $region42: #{tpu_custom_call.1} parent=11 // pred_check_branch
          %361 = sbr.rel (%p359) target = $region44
        $region43: #{tpu_custom_call.1} parent=11 // pred_region
          _
        $region44: #{tpu_custom_call.1} parent=11 // pred_fallthru
          _
        // Predicated region
        $region45: #{tpu_custom_call.1} parent=11 // pred_check
          %p362 = pneg %p235
        $region46: #{tpu_custom_call.1} parent=11 // pred_check_branch
          %364 = sbr.rel (%p362) target = $region48
        $region47: #{tpu_custom_call.1} parent=11 // pred_region
          _
        $region48: #{tpu_custom_call.1} parent=11 // pred_fallthru
          _
        // Predicated region
        $region49: #{tpu_custom_call.1} parent=11 // pred_check
          %p365 = pneg %p256
        $region50: #{tpu_custom_call.1} parent=11 // pred_check_branch
          %367 = sbr.rel (%p365) target = $region52
        $region51: #{tpu_custom_call.1} parent=11 // pred_region
          _
        $region52: #{tpu_custom_call.1} parent=11 // pred_fallthru
          _
        // Predicated region
        $region53: #{tpu_custom_call.1} parent=11 // pred_check
          %p368 = pneg %p277
        $region54: #{tpu_custom_call.1} parent=11 // pred_check_branch
          %370 = sbr.rel (%p368) target = $region56
        $region55: #{tpu_custom_call.1} parent=11 // pred_region
          _
        $region56: #{tpu_custom_call.1} parent=11 // pred_fallthru
          _
      $region12: #{tpu_custom_call.1} parent=5 // pred_fallthru
        _
      %p371 = scmp.lt.s32.totalorder %s20, 2
      // Predicated region
      $region57: #{tpu_custom_call.1} parent=5 // pred_check
        %p372 = pneg %p371
      $region58: #{tpu_custom_call.1} parent=5 // pred_check_branch
        %374 = sbr.rel (%p372) target = $region60
      $region59: #{tpu_custom_call.1} parent=5 // pred_region
        // Predicated region
        $region61: #{tpu_custom_call.1} parent=59 // pred_check
          %p375 = pneg %p40
        $region62: #{tpu_custom_call.1} parent=59 // pred_check_branch
          %377 = sbr.rel (%p375) target = $region64
        $region63: #{tpu_custom_call.1} parent=59 // pred_region
          %p378 = scmp.lt.s32.totalorder %s20, 1
          %s379 = scalar_select %p378, %s20, 1
          %s380 = smul.addr %s379, 8
          %s381 = scalar_lea.vmem %s0, %s380
        $region64: #{tpu_custom_call.1} parent=59 // pred_fallthru
          _
      $region60: #{tpu_custom_call.1} parent=5 // pred_fallthru
        _
      %p382 = scmp.le.s32.totalorder 1, %s20
      %p383 = scmp.lt.s32.totalorder %s20, 3
      %p384 = pnand %p382, %p383
      %p385 = pneg %p384
      // Predicated region
      $region65: #{tpu_custom_call.1} parent=5 // pred_check
        _
      $region66: #{tpu_custom_call.1} parent=5 // pred_check_branch
        %387 = sbr.rel (%p384) target = $region68
      $region67: #{tpu_custom_call.1} parent=5 // pred_region
        %s388 = ssub.s32 %s20, 1
        // Predicated region
        $region69: #{tpu_custom_call.1} parent=67 // pred_check
          %p389 = pneg %p109
        $region70: #{tpu_custom_call.1} parent=67 // pred_check_branch
          %391 = sbr.rel (%p389) target = $region72
        $region71: #{tpu_custom_call.1} parent=67 // pred_region
          %392 = dma.done [#allocation3], 8192
        $region72: #{tpu_custom_call.1} parent=67 // pred_fallthru
          _
        // Predicated region
        $region73: #{tpu_custom_call.1} parent=67 // pred_check
          %p393 = pneg %p151
        $region74: #{tpu_custom_call.1} parent=67 // pred_check_branch
          %395 = sbr.rel (%p393) target = $region76
        $region75: #{tpu_custom_call.1} parent=67 // pred_region
          %396 = dma.done [#allocation5], 8192
        $region76: #{tpu_custom_call.1} parent=67 // pred_fallthru
          _
        %p397 = scmp.lt.s32.totalorder %s25, 1
        %s398 = scalar_select %p397, %s25, 1
        %s399 = smul.addr %s398, 8
        %s400 = scalar_lea.vmem %s0, %s399
        %p401 = pneg %p46
        %p402 = pneg %p43
        %p403 = pneg %p67
        %p404 = pneg %p64
        %p405 = pneg %p88
        %p406 = pneg %p85
        %p407 = pneg %p109
        %p408 = pneg %p106
        %p409 = pneg %p130
        %p410 = pneg %p127
        %p411 = pneg %p151
        %p412 = pneg %p148
        %p413 = pneg %p172
        %p414 = pneg %p169
        %p415 = pneg %p193
        %p416 = pneg %p190
        %p417 = pneg %p214
        %p418 = pneg %p211
        %p419 = pneg %p235
        %p420 = pneg %p232
        %p421 = pneg %p256
        %p422 = pneg %p253
        %p423 = pneg %p277
        %p424 = pneg %p274
        %p425 = pneg %p303
        %p426 = pneg %p300
        %p427 = scmp.lt.s32.totalorder %s25, 1
        %s428 = scalar_select %p427, %s25, 1
        %s429 = smul.addr %s428, 8
        %s430 = scalar_lea.vmem %s12, %s429
        %p431 = scmp.lt.s32.totalorder %s25, 1
        %s432 = scalar_select %p431, %s25, 1
        %s433 = smul.addr %s432, 8
        %s434 = scalar_lea.vmem %s0, %s433
        %p435 = scmp.lt.s32.totalorder %s25, 1
        %s436 = scalar_select %p435, %s25, 1
        %s437 = smul.addr %s436, 8
        %s438 = scalar_lea.vmem %s12, %s437
        %v439 = vld [vmem:[%s434] sm:$0xff]
        %v440 = vld [vmem:[%s1] sm:$0xff]
        %v441 = vld [vmem:[%s1 + $0x8] sm:$0xff]
        %v442 = vld [vmem:[%s1 + $0x10] sm:$0xff]
        %v443 = vld [vmem:[%s1 + $0x18] sm:$0xff]
        %v444 = vld [vmem:[%s2] sm:$0x3]
        %v446 = vlaneseq
        %v447 = vshrl.u32 %v446, 7
        %v448 = vsub.s32 0, %v447
        %v449 = vrot.slane %v444, %v448
        %v450 = vlaneseq
        %v451 = vshrl.u32 %v450, 7
        %v452 = vsub.s32 1, %v451
        %v453 = vrot.slane %v444, %v452
        %vm456 = vcmask 130048
        %v458 = vsel %vm456, %v439, 0
        %460 = vmatprep.subr.mxu0 %v441
        %461 = vmatpush1.msra.mxu0 %v440
        %462 = vmatprep.subr.mxu0 %v443
        %463 = vmatpush1.msra.mxu0 %v442
        %464 = vmatprep.subr.mxu0 0.0
        %465 = vmatpush1.msra.mxu0 0.0
        %466 = vmatprep.subr.mxu0 0.0
        %467 = vmatpush1.msra.mxu0 0.0
        %468 = vmatprep.subr.mxu0 0.0
        %469 = vmatpush1.msra.mxu0 0.0
        %470 = vmatprep.subr.mxu0 0.0
        %471 = vmatpush1.msra.mxu0 0.0
        %472 = vmatprep.subr.mxu0 0.0
        %473 = vmatpush1.msra.mxu0 0.0
        %474 = vmatprep.subr.mxu0 0.0
        %475 = vmatpush1.msra.mxu0 0.0
        %476 = vmatprep.subr.mxu0 0.0
        %477 = vmatpush1.msra.mxu0 0.0
        %478 = vmatprep.subr.mxu0 0.0
        %479 = vmatpush1.msra.mxu0 0.0
        %480 = vmatprep.subr.mxu0 0.0
        %481 = vmatpush1.msra.mxu0 0.0
        %482 = vmatprep.subr.mxu0 0.0
        %483 = vmatpush1.msra.mxu0 0.0
        %484 = vmatprep.subr.mxu0 0.0
        %485 = vmatpush1.msra.mxu0 0.0
        %486 = vmatprep.subr.mxu0 0.0
        %487 = vmatpush1.msra.mxu0 0.0
        %488 = vmatprep.subr.mxu0 0.0
        %489 = vmatpush1.msra.mxu0 0.0
        %490 = vmatprep.subr.mxu0 0.0
        %491 = vmatpush1.msra.mxu0 0.0
        %492 = vmatprep.subr.mxu0 0.0
        %493 = vmatpush1.msra.mxu0 0.0
        %494 = vmatprep.subr.mxu0 0.0
        %495 = vmatpush1.msra.mxu0 0.0
        %496 = vmatprep.subr.mxu0 0.0
        %497 = vmatpush1.msra.mxu0 0.0
        %498 = vmatprep.subr.mxu0 0.0
        %499 = vmatpush1.msra.mxu0 0.0
        %500 = vmatprep.subr.mxu0 0.0
        %501 = vmatpush1.msra.mxu0 0.0
        %502 = vmatprep.subr.mxu0 0.0
        %503 = vmatpush1.msra.mxu0 0.0
        %504 = vmatprep.subr.mxu0 0.0
        %505 = vmatpush1.msra.mxu0 0.0
        %506 = vmatprep.subr.mxu0 0.0
        %507 = vmatpush1.msra.mxu0 0.0
        %508 = vmatprep.subr.mxu0 0.0
        %509 = vmatpush1.msra.mxu0 0.0
        %510 = vmatprep.subr.mxu0 0.0
        %511 = vmatpush1.msra.mxu0 0.0
        %512 = vmatprep.subr.mxu0 0.0
        %513 = vmatpush1.msra.mxu0 0.0
        %514 = vmatprep.subr.mxu0 0.0
        %515 = vmatpush1.msra.mxu0 0.0
        %516 = vmatprep.subr.mxu0 0.0
        %517 = vmatpush1.msra.mxu0 0.0
        %518 = vmatprep.subr.mxu0 0.0
        %519 = vmatpush1.msra.mxu0 0.0
        %520 = vmatprep.subr.mxu0 0.0
        %521 = vmatpush1.msra.mxu0 0.0
        %522 = vmatprep.subr.mxu0 0.0
        %523 = vmatpush1.msra.mxu0 0.0
        %524 = vmatprep.mubr.f32.mxu0 0.0
        %525 = vmatmul.mubr.f32.gmra.mrb[0].mxu0 %v458
        %v526 = vpop.f32.mrb[0].mxu0
        %v527 = vadd.f32 %v449, %v526
        %v528 = vpop.f32.mrb[0].mxu0
        %v529 = vadd.f32 %v453, %v528
        %530 = vdwg.mxu0
        %v531 = vmax.f32 %v527, 0.0
        %v532 = vmax.f32 %v529, 0.0
        %v533 = vld [vmem:[#allocation2] sm:$0xff]
        %v534 = vld [vmem:[#allocation2 + $0x8] sm:$0xff]
        %v535 = vld [vmem:[#allocation2 + $0x10] sm:$0xff]
        %v536 = vld [vmem:[#allocation2 + $0x18] sm:$0xff]
        %v537 = vld [vmem:[#allocation2 + $0x20] sm:$0xff]
        %v538 = vld [vmem:[#allocation2 + $0x28] sm:$0xff]
        %v539 = vld [vmem:[#allocation2 + $0x30] sm:$0xff]
        %v540 = vld [vmem:[#allocation2 + $0x38] sm:$0xff]
        %v541 = vld [vmem:[#allocation2 + $0x40] sm:$0xff]
        %v542 = vld [vmem:[#allocation2 + $0x48] sm:$0xff]
        %v543 = vld [vmem:[#allocation2 + $0x50] sm:$0xff]
        %v544 = vld [vmem:[#allocation2 + $0x58] sm:$0xff]
        %v545 = vld [vmem:[#allocation2 + $0x60] sm:$0xff]
        %v546 = vld [vmem:[#allocation2 + $0x68] sm:$0xff]
        %v547 = vld [vmem:[#allocation2 + $0x70] sm:$0xff]
        %v548 = vld [vmem:[#allocation2 + $0x78] sm:$0xff]
        %v549 = vld [vmem:[#allocation2 + $0x80] sm:$0xff]
        %v550 = vld [vmem:[#allocation2 + $0x88] sm:$0xff]
        %v551 = vld [vmem:[#allocation2 + $0x90] sm:$0xff]
        %v552 = vld [vmem:[#allocation2 + $0x98] sm:$0xff]
        %v553 = vld [vmem:[#allocation2 + $0xa0] sm:$0xff]
        %v554 = vld [vmem:[#allocation2 + $0xa8] sm:$0xff]
        %v555 = vld [vmem:[#allocation2 + $0xb0] sm:$0xff]
        %v556 = vld [vmem:[#allocation2 + $0xb8] sm:$0xff]
        %v557 = vld [vmem:[#allocation2 + $0xc0] sm:$0xff]
        %v558 = vld [vmem:[#allocation2 + $0xc8] sm:$0xff]
        %v559 = vld [vmem:[#allocation2 + $0xd0] sm:$0xff]
        %v560 = vld [vmem:[#allocation2 + $0xd8] sm:$0xff]
        %v561 = vld [vmem:[#allocation2 + $0xe0] sm:$0xff]
        %v562 = vld [vmem:[#allocation2 + $0xe8] sm:$0xff]
        %v563 = vld [vmem:[#allocation2 + $0xf0] sm:$0xff]
        %v564 = vld [vmem:[#allocation2 + $0xf8] sm:$0xff]
        %v565 = vld [vmem:[#allocation2 + $0x100] sm:$0xff]
        %v566 = vld [vmem:[#allocation2 + $0x108] sm:$0xff]
        %v567 = vld [vmem:[#allocation2 + $0x110] sm:$0xff]
        %v568 = vld [vmem:[#allocation2 + $0x118] sm:$0xff]
        %v569 = vld [vmem:[#allocation2 + $0x120] sm:$0xff]
        %v570 = vld [vmem:[#allocation2 + $0x128] sm:$0xff]
        %v571 = vld [vmem:[#allocation2 + $0x130] sm:$0xff]
        %v572 = vld [vmem:[#allocation2 + $0x138] sm:$0xff]
        %v573 = vld [vmem:[#allocation2 + $0x140] sm:$0xff]
        %v574 = vld [vmem:[#allocation2 + $0x148] sm:$0xff]
        %v575 = vld [vmem:[#allocation2 + $0x150] sm:$0xff]
        %v576 = vld [vmem:[#allocation2 + $0x158] sm:$0xff]
        %v577 = vld [vmem:[#allocation2 + $0x160] sm:$0xff]
        %v578 = vld [vmem:[#allocation2 + $0x168] sm:$0xff]
        %v579 = vld [vmem:[#allocation2 + $0x170] sm:$0xff]
        %v580 = vld [vmem:[#allocation2 + $0x178] sm:$0xff]
        %v581 = vld [vmem:[#allocation2 + $0x180] sm:$0xff]
        %v582 = vld [vmem:[#allocation2 + $0x188] sm:$0xff]
        %v583 = vld [vmem:[#allocation2 + $0x190] sm:$0xff]
        %v584 = vld [vmem:[#allocation2 + $0x198] sm:$0xff]
        %v585 = vld [vmem:[#allocation2 + $0x1a0] sm:$0xff]
        %v586 = vld [vmem:[#allocation2 + $0x1a8] sm:$0xff]
        %v587 = vld [vmem:[#allocation2 + $0x1b0] sm:$0xff]
        %v588 = vld [vmem:[#allocation2 + $0x1b8] sm:$0xff]
        %v589 = vld [vmem:[#allocation2 + $0x1c0] sm:$0xff]
        %v590 = vld [vmem:[#allocation2 + $0x1c8] sm:$0xff]
        %v591 = vld [vmem:[#allocation2 + $0x1d0] sm:$0xff]
        %v592 = vld [vmem:[#allocation2 + $0x1d8] sm:$0xff]
        %v593 = vld [vmem:[#allocation2 + $0x1e0] sm:$0xff]
        %v594 = vld [vmem:[#allocation2 + $0x1e8] sm:$0xff]
        %v595 = vld [vmem:[#allocation2 + $0x1f0] sm:$0xff]
        %v596 = vld [vmem:[#allocation2 + $0x1f8] sm:$0xff]
        %v597 = vld [vmem:[%s4] sm:$0x3]
        %v599 = vlaneseq
        %v600 = vshrl.u32 %v599, 7
        %v601 = vsub.s32 0, %v600
        %v602 = vrot.slane %v597, %v601
        %v603 = vlaneseq
        %v604 = vshrl.u32 %v603, 7
        %v605 = vsub.s32 1, %v604
        %v606 = vrot.slane %v597, %v605
        %609 = vmatprep.subr.mxu0 %v534
        %610 = vmatpush1.msra.mxu0 %v533
        %611 = vmatprep.subr.mxu0 %v536
        %612 = vmatpush1.msra.mxu0 %v535
        %613 = vmatprep.subr.mxu0 %v538
        %614 = vmatpush1.msra.mxu0 %v537
        %615 = vmatprep.subr.mxu0 %v540
        %616 = vmatpush1.msra.mxu0 %v539
        %617 = vmatprep.subr.mxu0 %v542
        %618 = vmatpush1.msra.mxu0 %v541
        %619 = vmatprep.subr.mxu0 %v544
        %620 = vmatpush1.msra.mxu0 %v543
        %621 = vmatprep.subr.mxu0 %v546
        %622 = vmatpush1.msra.mxu0 %v545
        %623 = vmatprep.subr.mxu0 %v548
        %624 = vmatpush1.msra.mxu0 %v547
        %625 = vmatprep.subr.mxu0 %v550
        %626 = vmatpush1.msra.mxu0 %v549
        %627 = vmatprep.subr.mxu0 %v552
        %628 = vmatpush1.msra.mxu0 %v551
        %629 = vmatprep.subr.mxu0 %v554
        %630 = vmatpush1.msra.mxu0 %v553
        %631 = vmatprep.subr.mxu0 %v556
        %632 = vmatpush1.msra.mxu0 %v555
        %633 = vmatprep.subr.mxu0 %v558
        %634 = vmatpush1.msra.mxu0 %v557
        %635 = vmatprep.subr.mxu0 %v560
        %636 = vmatpush1.msra.mxu0 %v559
        %637 = vmatprep.subr.mxu0 %v562
        %638 = vmatpush1.msra.mxu0 %v561
        %639 = vmatprep.subr.mxu0 %v564
        %640 = vmatpush1.msra.mxu0 %v563
        %641 = vmatprep.subr.mxu0 %v566
        %642 = vmatpush1.msra.mxu0 %v565
        %643 = vmatprep.subr.mxu0 %v568
        %644 = vmatpush1.msra.mxu0 %v567
        %645 = vmatprep.subr.mxu0 %v570
        %646 = vmatpush1.msra.mxu0 %v569
        %647 = vmatprep.subr.mxu0 %v572
        %648 = vmatpush1.msra.mxu0 %v571
        %649 = vmatprep.subr.mxu0 %v574
        %650 = vmatpush1.msra.mxu0 %v573
        %651 = vmatprep.subr.mxu0 %v576
        %652 = vmatpush1.msra.mxu0 %v575
        %653 = vmatprep.subr.mxu0 %v578
        %654 = vmatpush1.msra.mxu0 %v577
        %655 = vmatprep.subr.mxu0 %v580
        %656 = vmatpush1.msra.mxu0 %v579
        %657 = vmatprep.subr.mxu0 %v582
        %658 = vmatpush1.msra.mxu0 %v581
        %659 = vmatprep.subr.mxu0 %v584
        %660 = vmatpush1.msra.mxu0 %v583
        %661 = vmatprep.subr.mxu0 %v586
        %662 = vmatpush1.msra.mxu0 %v585
        %663 = vmatprep.subr.mxu0 %v588
        %664 = vmatpush1.msra.mxu0 %v587
        %665 = vmatprep.subr.mxu0 %v590
        %666 = vmatpush1.msra.mxu0 %v589
        %667 = vmatprep.subr.mxu0 %v592
        %668 = vmatpush1.msra.mxu0 %v591
        %669 = vmatprep.subr.mxu0 %v594
        %670 = vmatpush1.msra.mxu0 %v593
        %671 = vmatprep.subr.mxu0 %v596
        %672 = vmatpush1.msra.mxu0 %v595
        %673 = vmatprep.mubr.f32.mxu0 %v532
        %674 = vmatmul.mubr.f32.gmra.mrb[0].mxu0 %v531
        %v675 = vpop.f32.mrb[0].mxu0
        %v676 = vadd.f32 %v602, %v675
        %v677 = vpop.f32.mrb[0].mxu0
        %v678 = vadd.f32 %v606, %v677
        %679 = vdwg.mxu0
        %v680 = vmul.f32 %v676, %v676
        %v681 = vmul.f32 %v678, %v678
        %v682 = vld [vmem:[#allocation4] sm:$0xff]
        %v683 = vld [vmem:[#allocation4 + $0x8] sm:$0xff]
        %v684 = vld [vmem:[#allocation4 + $0x10] sm:$0xff]
        %v685 = vld [vmem:[#allocation4 + $0x18] sm:$0xff]
        %v686 = vld [vmem:[#allocation4 + $0x20] sm:$0xff]
        %v687 = vld [vmem:[#allocation4 + $0x28] sm:$0xff]
        %v688 = vld [vmem:[#allocation4 + $0x30] sm:$0xff]
        %v689 = vld [vmem:[#allocation4 + $0x38] sm:$0xff]
        %v690 = vld [vmem:[#allocation4 + $0x40] sm:$0xff]
        %v691 = vld [vmem:[#allocation4 + $0x48] sm:$0xff]
        %v692 = vld [vmem:[#allocation4 + $0x50] sm:$0xff]
        %v693 = vld [vmem:[#allocation4 + $0x58] sm:$0xff]
        %v694 = vld [vmem:[#allocation4 + $0x60] sm:$0xff]
        %v695 = vld [vmem:[#allocation4 + $0x68] sm:$0xff]
        %v696 = vld [vmem:[#allocation4 + $0x70] sm:$0xff]
        %v697 = vld [vmem:[#allocation4 + $0x78] sm:$0xff]
        %v698 = vld [vmem:[#allocation4 + $0x80] sm:$0xff]
        %v699 = vld [vmem:[#allocation4 + $0x88] sm:$0xff]
        %v700 = vld [vmem:[#allocation4 + $0x90] sm:$0xff]
        %v701 = vld [vmem:[#allocation4 + $0x98] sm:$0xff]
        %v702 = vld [vmem:[#allocation4 + $0xa0] sm:$0xff]
        %v703 = vld [vmem:[#allocation4 + $0xa8] sm:$0xff]
        %v704 = vld [vmem:[#allocation4 + $0xb0] sm:$0xff]
        %v705 = vld [vmem:[#allocation4 + $0xb8] sm:$0xff]
        %v706 = vld [vmem:[#allocation4 + $0xc0] sm:$0xff]
        %v707 = vld [vmem:[#allocation4 + $0xc8] sm:$0xff]
        %v708 = vld [vmem:[#allocation4 + $0xd0] sm:$0xff]
        %v709 = vld [vmem:[#allocation4 + $0xd8] sm:$0xff]
        %v710 = vld [vmem:[#allocation4 + $0xe0] sm:$0xff]
        %v711 = vld [vmem:[#allocation4 + $0xe8] sm:$0xff]
        %v712 = vld [vmem:[#allocation4 + $0xf0] sm:$0xff]
        %v713 = vld [vmem:[#allocation4 + $0xf8] sm:$0xff]
        %v714 = vld [vmem:[#allocation4 + $0x100] sm:$0xff]
        %v715 = vld [vmem:[#allocation4 + $0x108] sm:$0xff]
        %v716 = vld [vmem:[#allocation4 + $0x110] sm:$0xff]
        %v717 = vld [vmem:[#allocation4 + $0x118] sm:$0xff]
        %v718 = vld [vmem:[#allocation4 + $0x120] sm:$0xff]
        %v719 = vld [vmem:[#allocation4 + $0x128] sm:$0xff]
        %v720 = vld [vmem:[#allocation4 + $0x130] sm:$0xff]
        %v721 = vld [vmem:[#allocation4 + $0x138] sm:$0xff]
        %v722 = vld [vmem:[#allocation4 + $0x140] sm:$0xff]
        %v723 = vld [vmem:[#allocation4 + $0x148] sm:$0xff]
        %v724 = vld [vmem:[#allocation4 + $0x150] sm:$0xff]
        %v725 = vld [vmem:[#allocation4 + $0x158] sm:$0xff]
        %v726 = vld [vmem:[#allocation4 + $0x160] sm:$0xff]
        %v727 = vld [vmem:[#allocation4 + $0x168] sm:$0xff]
        %v728 = vld [vmem:[#allocation4 + $0x170] sm:$0xff]
        %v729 = vld [vmem:[#allocation4 + $0x178] sm:$0xff]
        %v730 = vld [vmem:[#allocation4 + $0x180] sm:$0xff]
        %v731 = vld [vmem:[#allocation4 + $0x188] sm:$0xff]
        %v732 = vld [vmem:[#allocation4 + $0x190] sm:$0xff]
        %v733 = vld [vmem:[#allocation4 + $0x198] sm:$0xff]
        %v734 = vld [vmem:[#allocation4 + $0x1a0] sm:$0xff]
        %v735 = vld [vmem:[#allocation4 + $0x1a8] sm:$0xff]
        %v736 = vld [vmem:[#allocation4 + $0x1b0] sm:$0xff]
        %v737 = vld [vmem:[#allocation4 + $0x1b8] sm:$0xff]
        %v738 = vld [vmem:[#allocation4 + $0x1c0] sm:$0xff]
        %v739 = vld [vmem:[#allocation4 + $0x1c8] sm:$0xff]
        %v740 = vld [vmem:[#allocation4 + $0x1d0] sm:$0xff]
        %v741 = vld [vmem:[#allocation4 + $0x1d8] sm:$0xff]
        %v742 = vld [vmem:[#allocation4 + $0x1e0] sm:$0xff]
        %v743 = vld [vmem:[#allocation4 + $0x1e8] sm:$0xff]
        %v744 = vld [vmem:[#allocation4 + $0x1f0] sm:$0xff]
        %v745 = vld [vmem:[#allocation4 + $0x1f8] sm:$0xff]
        %746 = vmatprep.subr.mxu0 %v683
        %747 = vmatpush1.msra.mxu0 %v682
        %748 = vmatprep.subr.mxu0 %v685
        %749 = vmatpush1.msra.mxu0 %v684
        %750 = vmatprep.subr.mxu0 %v687
        %751 = vmatpush1.msra.mxu0 %v686
        %752 = vmatprep.subr.mxu0 %v689
        %753 = vmatpush1.msra.mxu0 %v688
        %754 = vmatprep.subr.mxu0 %v691
        %755 = vmatpush1.msra.mxu0 %v690
        %756 = vmatprep.subr.mxu0 %v693
        %757 = vmatpush1.msra.mxu0 %v692
        %758 = vmatprep.subr.mxu0 %v695
        %759 = vmatpush1.msra.mxu0 %v694
        %760 = vmatprep.subr.mxu0 %v697
        %761 = vmatpush1.msra.mxu0 %v696
        %762 = vmatprep.subr.mxu0 %v699
        %763 = vmatpush1.msra.mxu0 %v698
        %764 = vmatprep.subr.mxu0 %v701
        %765 = vmatpush1.msra.mxu0 %v700
        %766 = vmatprep.subr.mxu0 %v703
        %767 = vmatpush1.msra.mxu0 %v702
        %768 = vmatprep.subr.mxu0 %v705
        %769 = vmatpush1.msra.mxu0 %v704
        %770 = vmatprep.subr.mxu0 %v707
        %771 = vmatpush1.msra.mxu0 %v706
        %772 = vmatprep.subr.mxu0 %v709
        %773 = vmatpush1.msra.mxu0 %v708
        %774 = vmatprep.subr.mxu0 %v711
        %775 = vmatpush1.msra.mxu0 %v710
        %776 = vmatprep.subr.mxu0 %v713
        %777 = vmatpush1.msra.mxu0 %v712
        %778 = vmatprep.subr.mxu0 %v715
        %779 = vmatpush1.msra.mxu0 %v714
        %780 = vmatprep.subr.mxu0 %v717
        %781 = vmatpush1.msra.mxu0 %v716
        %782 = vmatprep.subr.mxu0 %v719
        %783 = vmatpush1.msra.mxu0 %v718
        %784 = vmatprep.subr.mxu0 %v721
        %785 = vmatpush1.msra.mxu0 %v720
        %786 = vmatprep.subr.mxu0 %v723
        %787 = vmatpush1.msra.mxu0 %v722
        %788 = vmatprep.subr.mxu0 %v725
        %789 = vmatpush1.msra.mxu0 %v724
        %790 = vmatprep.subr.mxu0 %v727
        %791 = vmatpush1.msra.mxu0 %v726
        %792 = vmatprep.subr.mxu0 %v729
        %793 = vmatpush1.msra.mxu0 %v728
        %794 = vmatprep.subr.mxu0 %v731
        %795 = vmatpush1.msra.mxu0 %v730
        %796 = vmatprep.subr.mxu0 %v733
        %797 = vmatpush1.msra.mxu0 %v732
        %798 = vmatprep.subr.mxu0 %v735
        %799 = vmatpush1.msra.mxu0 %v734
        %800 = vmatprep.subr.mxu0 %v737
        %801 = vmatpush1.msra.mxu0 %v736
        %802 = vmatprep.subr.mxu0 %v739
        %803 = vmatpush1.msra.mxu0 %v738
        %804 = vmatprep.subr.mxu0 %v741
        %805 = vmatpush1.msra.mxu0 %v740
        %806 = vmatprep.subr.mxu0 %v743
        %807 = vmatpush1.msra.mxu0 %v742
        %808 = vmatprep.subr.mxu0 %v745
        %809 = vmatpush1.msra.mxu0 %v744
        %810 = vmatprep.mubr.f32.mxu0 %v681
        %811 = vmatmul.mubr.f32.gmra.mrb[0].mxu0 %v680
        %v812 = vpop.f32.mrb[0].mxu0
        %v813 = vadd.f32 1e-05, %v812
        %v814 = vpop.f32.mrb[0].mxu0
        %v815 = vadd.f32 1e-05, %v814
        %816 = vdwg.mxu0
        %v817 = vrsqrt.pop %v813
        %v818 = vrsqrt.pop %v815
        %v819 = vmul.f32 %v676, %v817
        %v820 = vmul.f32 %v678, %v818
        %v821 = vld [vmem:[%s6] sm:$0x3]
        %v823 = vlaneseq
        %v824 = vshrl.u32 %v823, 7
        %v825 = vsub.s32 0, %v824
        %v826 = vrot.slane %v821, %v825
        %v827 = vlaneseq
        %v828 = vshrl.u32 %v827, 7
        %v829 = vsub.s32 1, %v828
        %v830 = vrot.slane %v821, %v829
        %v833 = vmul.f32 %v819, %v826
        %v834 = vmul.f32 %v820, %v830
        %v835 = vld [vmem:[%s7] sm:$0x3]
        %v837 = vlaneseq
        %v838 = vshrl.u32 %v837, 7
        %v839 = vsub.s32 0, %v838
        %v840 = vrot.slane %v835, %v839
        %v841 = vlaneseq
        %v842 = vshrl.u32 %v841, 7
        %v843 = vsub.s32 1, %v842
        %v844 = vrot.slane %v835, %v843
        %v847 = vadd.f32 %v833, %v840
        %v848 = vadd.f32 %v834, %v844
        %v849 = vmax.f32 %v847, 0.0
        %v850 = vmax.f32 %v848, 0.0
        %v851 = vld [vmem:[%s8] sm:$0xff]
        %v852 = vld [vmem:[%s8 + $0x8] sm:$0xff]
        %v853 = vld [vmem:[%s8 + $0x10] sm:$0xff]
        %v854 = vld [vmem:[%s8 + $0x18] sm:$0xff]
        %v855 = vld [vmem:[%s8 + $0x20] sm:$0xff]
        %v856 = vld [vmem:[%s8 + $0x28] sm:$0xff]
        %v857 = vld [vmem:[%s8 + $0x30] sm:$0xff]
        %v858 = vld [vmem:[%s8 + $0x38] sm:$0xff]
        %v859 = vld [vmem:[%s8 + $0x40] sm:$0xff]
        %v860 = vld [vmem:[%s8 + $0x48] sm:$0xff]
        %v861 = vld [vmem:[%s8 + $0x50] sm:$0xff]
        %v862 = vld [vmem:[%s8 + $0x58] sm:$0xff]
        %v863 = vld [vmem:[%s8 + $0x60] sm:$0xff]
        %v864 = vld [vmem:[%s8 + $0x68] sm:$0xff]
        %v865 = vld [vmem:[%s8 + $0x70] sm:$0xff]
        %v866 = vld [vmem:[%s8 + $0x78] sm:$0xff]
        %v867 = vld [vmem:[%s8 + $0x80] sm:$0xff]
        %v868 = vld [vmem:[%s8 + $0x88] sm:$0xff]
        %v869 = vld [vmem:[%s8 + $0x90] sm:$0xff]
        %v870 = vld [vmem:[%s8 + $0x98] sm:$0xff]
        %v871 = vld [vmem:[%s8 + $0xa0] sm:$0xff]
        %v872 = vld [vmem:[%s8 + $0xa8] sm:$0xff]
        %v873 = vld [vmem:[%s8 + $0xb0] sm:$0xff]
        %v874 = vld [vmem:[%s8 + $0xb8] sm:$0xff]
        %v875 = vld [vmem:[%s8 + $0xc0] sm:$0xff]
        %v876 = vld [vmem:[%s8 + $0xc8] sm:$0xff]
        %v877 = vld [vmem:[%s8 + $0xd0] sm:$0xff]
        %v878 = vld [vmem:[%s8 + $0xd8] sm:$0xff]
        %v879 = vld [vmem:[%s8 + $0xe0] sm:$0xff]
        %v880 = vld [vmem:[%s8 + $0xe8] sm:$0xff]
        %v881 = vld [vmem:[%s8 + $0xf0] sm:$0xff]
        %v882 = vld [vmem:[%s8 + $0xf8] sm:$0xff]
        %v883 = vld [vmem:[%s9] sm:$0x1]
        %v885 = vlaneseq
        %v886 = vshrl.u32 %v885, 7
        %v887 = vsub.s32 0, %v886
        %v888 = vrot.slane %v883, %v887
        %890 = vmatprep.subr.mxu0 0.0
        %891 = vmatpush1.msra.mxu0 %v851
        %892 = vmatprep.subr.mxu0 0.0
        %893 = vmatpush1.msra.mxu0 %v852
        %894 = vmatprep.subr.mxu0 0.0
        %895 = vmatpush1.msra.mxu0 %v853
        %896 = vmatprep.subr.mxu0 0.0
        %897 = vmatpush1.msra.mxu0 %v854
        %898 = vmatprep.subr.mxu0 0.0
        %899 = vmatpush1.msra.mxu0 %v855
        %900 = vmatprep.subr.mxu0 0.0
        %901 = vmatpush1.msra.mxu0 %v856
        %902 = vmatprep.subr.mxu0 0.0
        %903 = vmatpush1.msra.mxu0 %v857
        %904 = vmatprep.subr.mxu0 0.0
        %905 = vmatpush1.msra.mxu0 %v858
        %906 = vmatprep.subr.mxu0 0.0
        %907 = vmatpush1.msra.mxu0 %v859
        %908 = vmatprep.subr.mxu0 0.0
        %909 = vmatpush1.msra.mxu0 %v860
        %910 = vmatprep.subr.mxu0 0.0
        %911 = vmatpush1.msra.mxu0 %v861
        %912 = vmatprep.subr.mxu0 0.0
        %913 = vmatpush1.msra.mxu0 %v862
        %914 = vmatprep.subr.mxu0 0.0
        %915 = vmatpush1.msra.mxu0 %v863
        %916 = vmatprep.subr.mxu0 0.0
        %917 = vmatpush1.msra.mxu0 %v864
        %918 = vmatprep.subr.mxu0 0.0
        %919 = vmatpush1.msra.mxu0 %v865
        %920 = vmatprep.subr.mxu0 0.0
        %921 = vmatpush1.msra.mxu0 %v866
        %922 = vmatprep.subr.mxu0 0.0
        %923 = vmatpush1.msra.mxu0 %v867
        %924 = vmatprep.subr.mxu0 0.0
        %925 = vmatpush1.msra.mxu0 %v868
        %926 = vmatprep.subr.mxu0 0.0
        %927 = vmatpush1.msra.mxu0 %v869
        %928 = vmatprep.subr.mxu0 0.0
        %929 = vmatpush1.msra.mxu0 %v870
        %930 = vmatprep.subr.mxu0 0.0
        %931 = vmatpush1.msra.mxu0 %v871
        %932 = vmatprep.subr.mxu0 0.0
        %933 = vmatpush1.msra.mxu0 %v872
        %934 = vmatprep.subr.mxu0 0.0
        %935 = vmatpush1.msra.mxu0 %v873
        %936 = vmatprep.subr.mxu0 0.0
        %937 = vmatpush1.msra.mxu0 %v874
        %938 = vmatprep.subr.mxu0 0.0
        %939 = vmatpush1.msra.mxu0 %v875
        %940 = vmatprep.subr.mxu0 0.0
        %941 = vmatpush1.msra.mxu0 %v876
        %942 = vmatprep.subr.mxu0 0.0
        %943 = vmatpush1.msra.mxu0 %v877
        %944 = vmatprep.subr.mxu0 0.0
        %945 = vmatpush1.msra.mxu0 %v878
        %946 = vmatprep.subr.mxu0 0.0
        %947 = vmatpush1.msra.mxu0 %v879
        %948 = vmatprep.subr.mxu0 0.0
        %949 = vmatpush1.msra.mxu0 %v880
        %950 = vmatprep.subr.mxu0 0.0
        %951 = vmatpush1.msra.mxu0 %v881
        %952 = vmatprep.subr.mxu0 0.0
        %953 = vmatpush1.msra.mxu0 %v882
        %954 = vmatprep.mubr.f32.mxu0 %v850
        %955 = vmatmul.mubr.f32.gmra.mrb[0].mxu0 %v849
        %v956 = vpop.f32.mrb[0].mxu0
        %v957 = vadd.f32 %v888, %v956
        %v958 = vpop.f32.mrb[0].mxu0
        %959 = vdwg.mxu0
        %v960 = vmax.f32 %v957, 0.0
        %v961 = vld [vmem:[%s10] sm:$0xff]
        %v962 = vld [vmem:[%s10 + $0x8] sm:$0xff]
        %v963 = vld [vmem:[%s10 + $0x10] sm:$0xff]
        %v964 = vld [vmem:[%s10 + $0x18] sm:$0xff]
        %v965 = vld [vmem:[%s11] sm:$0x1]
        %v967 = vlaneseq
        %v968 = vshrl.u32 %v967, 7
        %v969 = vsub.s32 0, %v968
        %v970 = vrot.slane %v965, %v969
        %vm972 = vcmask 261120
        %v974 = vsel %vm972, %v960, 0
        %976 = vmatprep.subr.mxu0 0.0
        %977 = vmatpush1.msra.mxu0 %v961
        %978 = vmatprep.subr.mxu0 0.0
        %979 = vmatpush1.msra.mxu0 %v962
        %980 = vmatprep.subr.mxu0 0.0
        %981 = vmatpush1.msra.mxu0 %v963
        %982 = vmatprep.subr.mxu0 0.0
        %983 = vmatpush1.msra.mxu0 %v964
        %984 = vmatprep.subr.mxu0 0.0
        %985 = vmatpush1.msra.mxu0 0.0
        %986 = vmatprep.subr.mxu0 0.0
        %987 = vmatpush1.msra.mxu0 0.0
        %988 = vmatprep.subr.mxu0 0.0
        %989 = vmatpush1.msra.mxu0 0.0
        %990 = vmatprep.subr.mxu0 0.0
        %991 = vmatpush1.msra.mxu0 0.0
        %992 = vmatprep.subr.mxu0 0.0
        %993 = vmatpush1.msra.mxu0 0.0
        %994 = vmatprep.subr.mxu0 0.0
        %995 = vmatpush1.msra.mxu0 0.0
        %996 = vmatprep.subr.mxu0 0.0
        %997 = vmatpush1.msra.mxu0 0.0
        %998 = vmatprep.subr.mxu0 0.0
        %999 = vmatpush1.msra.mxu0 0.0
        %1000 = vmatprep.subr.mxu0 0.0
        %1001 = vmatpush1.msra.mxu0 0.0
        %1002 = vmatprep.subr.mxu0 0.0
        %1003 = vmatpush1.msra.mxu0 0.0
        %1004 = vmatprep.subr.mxu0 0.0
        %1005 = vmatpush1.msra.mxu0 0.0
        %1006 = vmatprep.subr.mxu0 0.0
        %1007 = vmatpush1.msra.mxu0 0.0
        %1008 = vmatprep.subr.mxu0 0.0
        %1009 = vmatpush1.msra.mxu0 0.0
        %1010 = vmatprep.subr.mxu0 0.0
        %1011 = vmatpush1.msra.mxu0 0.0
        %1012 = vmatprep.subr.mxu0 0.0
        %1013 = vmatpush1.msra.mxu0 0.0
        %1014 = vmatprep.subr.mxu0 0.0
        %1015 = vmatpush1.msra.mxu0 0.0
        %1016 = vmatprep.subr.mxu0 0.0
        %1017 = vmatpush1.msra.mxu0 0.0
        %1018 = vmatprep.subr.mxu0 0.0
        %1019 = vmatpush1.msra.mxu0 0.0
        %1020 = vmatprep.subr.mxu0 0.0
        %1021 = vmatpush1.msra.mxu0 0.0
        %1022 = vmatprep.subr.mxu0 0.0
        %1023 = vmatpush1.msra.mxu0 0.0
        %1024 = vmatprep.subr.mxu0 0.0
        %1025 = vmatpush1.msra.mxu0 0.0
        %1026 = vmatprep.subr.mxu0 0.0
        %1027 = vmatpush1.msra.mxu0 0.0
        %1028 = vmatprep.subr.mxu0 0.0
        %1029 = vmatpush1.msra.mxu0 0.0
        %1030 = vmatprep.subr.mxu0 0.0
        %1031 = vmatpush1.msra.mxu0 0.0
        %1032 = vmatprep.subr.mxu0 0.0
        %1033 = vmatpush1.msra.mxu0 0.0
        %1034 = vmatprep.subr.mxu0 0.0
        %1035 = vmatpush1.msra.mxu0 0.0
        %1036 = vmatprep.subr.mxu0 0.0
        %1037 = vmatpush1.msra.mxu0 0.0
        %1038 = vmatprep.subr.mxu0 0.0
        %1039 = vmatpush1.msra.mxu0 0.0
        %1040 = vmatprep.mubr.f32.mxu0 0.0
        %1041 = vmatmul.mubr.f32.gmra.mrb[0].mxu0 %v974
        %v1042 = vpop.f32.mrb[0].mxu0
        %v1043 = vadd.f32 %v970, %v1042
        %v1044 = vpop.f32.mrb[0].mxu0
        %1045 = vdwg.mxu0
        %vm1046 = vcmask 15360
        %1047 = vst.msk [vmem:[%s438] sm:$0xff] %vm1046, %v1043
        %p1048 = scmp.lt.s32.totalorder %s25, 1
        %s1049 = scalar_select %p1048, %s25, 1
        %s1050 = smul.addr %s1049, 8
        %s1051 = scalar_lea.vmem %s12, %s1050
        // Predicated region
        $region77: #{tpu_custom_call.1} parent=67 // pred_check
          %p1052 = pneg %p300
        $region78: #{tpu_custom_call.1} parent=67 // pred_check_branch
          %1054 = sbr.rel (%p1052) target = $region80
        $region79: #{tpu_custom_call.1} parent=67 // pred_region
          _
        $region80: #{tpu_custom_call.1} parent=67 // pred_fallthru
          _
      $region68: #{tpu_custom_call.1} parent=5 // pred_fallthru
        _
      %p1055 = scmp.le.s32.totalorder 2, %s20
      // Predicated region
      $region81: #{tpu_custom_call.1} parent=5 // pred_check
        %p1056 = pneg %p1055
      $region82: #{tpu_custom_call.1} parent=5 // pred_check_branch
        %1058 = sbr.rel (%p1056) target = $region84
      $region83: #{tpu_custom_call.1} parent=5 // pred_region
        %s1059 = ssub.s32 %s20, 2
        // Predicated region
        $region85: #{tpu_custom_call.1} parent=83 // pred_check
          %p1060 = pneg %p306
        $region86: #{tpu_custom_call.1} parent=83 // pred_check_branch
          %1062 = sbr.rel (%p1060) target = $region88
        $region87: #{tpu_custom_call.1} parent=83 // pred_region
          %p1063 = scmp.lt.s32.totalorder %s26, 1
          %s1064 = scalar_select %p1063, %s26, 1
          %s1065 = smul.addr %s1064, 8
          %s1066 = scalar_lea.vmem %s12, %s1065
        $region88: #{tpu_custom_call.1} parent=83 // pred_fallthru
          _
      $region84: #{tpu_custom_call.1} parent=5 // pred_fallthru
        _
    $region6: #{tpu_custom_call.1} parent=1 // loop_footer
      %s24 = sadd.s32 1, %s20
    $region7: #{tpu_custom_call.1} parent=1 // loop_footer_branch
      %19 = sbr.rel target = $region3
    $region8: #{tpu_custom_call.1} parent=1 // loop_exit
      _
    %1067 = vsyncpa [#allocation3], 1
    %s1068 = scalar_lea.sflag [#allocation3], 1
    %1069 = vsyncpa %s1068, 1
    %1070 = vsyncpa [#allocation5], 1

</llo_original>
